<compile_context>
chip_gen: v6e
topology: v6e:2x2x1
jax: 0.10.0
libtpu: 0.0.40
codegen_flags: <defaults>
</compile_context>

<pallas_src>
import functools
import math

import jax
import jax.numpy as jnp
from jax import lax
from jax.experimental import pallas as pl
from jax.experimental.pallas import tpu as pltpu

EPS = 1e-5                       # BatchNorm eps
LANE = 128                       # channel / class dims padded to this
_VMEM_LIMIT = 32 * 1024 * 1024   # sized for v7x (64 MiB physical per TC)


def _round_up(x, m):
    return ((x + m - 1) // m) * m


def _pick_rm(oh, ow, target_rows=256):
    """Smallest divisor of `oh` whose row chunk feeds the MXU with
    M = rm*ow >= target_rows; falls back to the whole image."""
    want = max(1, -(-target_rows // ow))
    for d in range(want, oh + 1):
        if oh % d == 0:
            return d
    return oh


# ---------------------------------------------------------------------------
# Pallas kernels
# ---------------------------------------------------------------------------
def _conv_tap_kernel(*refs, kh, kw, stride, oh, ow, wps, hps, rm, relu, has_res):
    """Direct (im2col-free) conv + folded BN (+ residual) (+ ReLU).

    refs:
      xs_ref  (1, FLAT, Cin)    bf16  flattened parity-plane activation
      w_ref   (kh*kw, Cin, tn)  bf16  weights for this Cout tile
      s_ref/b_ref (1, tn)       f32   folded BN scale / bias
      [r_ref  (1, OH, OW, tn)   bf16  residual]
      o_ref   (1, OH, OW, tn)   bf16
      acc_ref (rm*wps, tn)      f32   VMEM scratch accumulator
    """
    if has_res:
        xs_ref, w_ref, s_ref, b_ref, r_ref, o_ref, acc_ref = refs
    else:
        xs_ref, w_ref, s_ref, b_ref, o_ref, acc_ref = refs
        r_ref = None
    sc = s_ref[...]                       # hoisted out of the chunk loop
    bi = b_ref[...]
    mrows = rm * wps

    def chunk_body(c, carry):
        r0 = c * rm
        # kh*kw tap matmuls over an rm-row slab (M = rm*wps), accumulating
        # into a VMEM scratch; the W tap shift is folded into the slice start.
        first = True
        for di in range(kh):
            for dj in range(kw):
                p = (di % stride) * stride + (dj % stride)     # parity plane
                start = (p * hps + di // stride + r0) * wps + dj // stride
                lhs = xs_ref[0, pl.ds(start, mrows), :]        # (mrows, Cin)
                part = jnp.dot(lhs, w_ref[di * kw + dj],
                               preferred_element_type=jnp.float32)
                if first:
                    acc_ref[...] = part
                    first = False
                else:
                    acc_ref[...] += part
        # f32 epilogue per output row; halo columns (j >= ow) are never read.
        for i in range(rm):
            y = acc_ref[pl.ds(i * wps, ow), :] * sc + bi
            if has_res:
                y = y + r_ref[0, r0 + i, :, :].astype(jnp.float32)
            if relu:
                y = jnp.maximum(y, 0.0)
            o_ref[0, r0 + i, :, :] = y.astype(o_ref.dtype)
        return carry

    lax.fori_loop(0, oh // rm, chunk_body, 0)


def _maxpool_tap_kernel(xs_ref, o_ref, *, k, stride, oh, ow, wps, hps):
    # Elementwise max over the k*k shifted window slices (VPU only, no im2col).
    def row_body(r, carry):
        m = None
        for di in range(k):
            for dj in range(k):
                p = (di % stride) * stride + (dj % stride)
                start = (p * hps + di // stride + r) * wps + dj // stride
                v = xs_ref[0, pl.ds(start, ow), :]
                m = v if m is None else jnp.maximum(m, v)
        o_ref[0, r, :, :] = m.astype(o_ref.dtype)
        return carry

    lax.fori_loop(0, oh, row_body, 0)


def _avgpool_fc_kernel(x_ref, w_ref, b_ref, o_ref):
    # x_ref: (Np, HW, C) bf16 -> spatial mean (f32) -> fused FC (bf16 MXU,
    # f32 accumulate + bias).
    hw = x_ref.shape[1]
    pooled = jnp.sum(x_ref[...].astype(jnp.float32), axis=1) * (1.0 / hw)
    y = jnp.dot(pooled.astype(w_ref.dtype), w_ref[...],
                preferred_element_type=jnp.float32) + b_ref[...]
    o_ref[...] = y


# ---------------------------------------------------------------------------
# Wrappers
# ---------------------------------------------------------------------------
def _parity_planes_flat(x, kh, kw, stride, pad, pad_value):
    """Spatially pad, regroup into stride*stride phase planes and flatten
    (H, W) so every conv/pool tap is one contiguous 2-D slice in the kernel.
    Pure re-layout (1x activation bytes), no im2col expansion.  One extra
    plane row is allocated so slab reads never run past the buffer."""
    N, H, W, C = x.shape
    s = stride
    OH = (H + 2 * pad - kh) // s + 1
    OW = (W + 2 * pad - kw) // s + 1
    Hps = OH + (kh - 1) // s + 1            # +1: headroom for full-width taps
    Wps = OW + (kw - 1) // s
    Hp, Wp = s * Hps, s * Wps
    xp = jnp.pad(x, ((0, 0),
                     (pad, max(0, Hp - H - pad)),
                     (pad, max(0, Wp - W - pad)),
                     (0, 0)), constant_values=pad_value)
    xp = xp[:, :Hp, :Wp, :]
    xs = xp.reshape(N, Hps, s, Wps, s, C).transpose(0, 2, 4, 1, 3, 5)
    xs = xs.reshape(N, s * s * Hps * Wps, C).astype(jnp.bfloat16)
    return xs, OH, OW, Hps, Wps


def conv_bn(x, w, scale, bias, stride, pad, relu=True, residual=None):
    """x: (N, H, W, Cx) activation, Cx a multiple of 128 (or pre-padded
    im2col'd stem).  w: (kh, kw, cin, cout) f32 with cin <= Cx.
    Returns (N, OH, OW, round_up(cout, 128)) bf16."""
    kh, kw, cin, cout = w.shape

    if kh == 1 and kw == 1 and stride > 1:
        # 1x1 conv: spatially subsample in the wrapper -> pure matmul.
        x = x[:, ::stride, ::stride, :]
        stride = 1

    N = x.shape[0]
    if kh == 1 and kw == 1:
        _, H, W, Cx = x.shape
        OH, OW, Hps, Wps = H, W, H, W
        xs = x.reshape(N, H * W, Cx).astype(jnp.bfloat16)
        wk = w.reshape(1, cin, cout)
        taps = 1
    else:
        xs, OH, OW, Hps, Wps = _parity_planes_flat(x, kh, kw, stride, pad, 0.0)
        Cx = xs.shape[-1]
        wk = w.reshape(kh * kw, cin, cout)
        taps = kh * kw

    cout_p = _round_up(cout, LANE)
    wp = jnp.zeros((taps, Cx, cout_p), jnp.bfloat16).at[:, :cin, :cout].set(
        wk.astype(jnp.bfloat16))
    sc = jnp.zeros((1, cout_p), jnp.float32).at[0, :cout].set(scale)
    bi = jnp.zeros((1, cout_p), jnp.float32).at[0, :cout].set(bias)

    tn = LANE                      # 128: v5e-friendly, halves acc/output blocks
    rm = _pick_rm(OH, OW)
    grid = (N, cout_p // tn)

    in_specs = [
        pl.BlockSpec((1, xs.shape[1], Cx), lambda n, j: (n, 0, 0)),
        pl.BlockSpec((taps, Cx, tn), lambda n, j: (0, 0, j)),
        pl.BlockSpec((1, tn), lambda n, j: (0, j)),
        pl.BlockSpec((1, tn), lambda n, j: (0, j)),
    ]
    args = [xs, wp, sc, bi]
    if residual is not None:
        in_specs.append(pl.BlockSpec((1, OH, OW, tn), lambda n, j: (n, 0, 0, j)))
        args.append(residual.astype(jnp.bfloat16))

    kernel = functools.partial(
        _conv_tap_kernel, kh=kh, kw=kw, stride=stride, oh=OH, ow=OW,
        wps=Wps, hps=Hps, rm=rm, relu=relu, has_res=residual is not None)

    flops = 2 * N * OH * OW * kh * kw * cin * cout          # true (unpadded)
    bytes_acc = (xs.size * 2 + wp.size * 2 +
                 N * OH * OW * cout_p * 2 * (2 if residual is not None else 1))
    return pl.pallas_call(
        kernel,
        out_shape=jax.ShapeDtypeStruct((N, OH, OW, cout_p), jnp.bfloat16),
        grid=grid,
        in_specs=in_specs,
        out_specs=pl.BlockSpec((1, OH, OW, tn), lambda n, j: (n, 0, 0, j)),
        scratch_shapes=[pltpu.VMEM((rm * Wps, tn), jnp.float32)],
        compiler_params=pltpu.CompilerParams(
            dimension_semantics=("parallel", "parallel"),
            vmem_limit_bytes=_VMEM_LIMIT),
        cost_estimate=pl.CostEstimate(flops=int(flops), transcendentals=0,
                                      bytes_accessed=int(bytes_acc)),
    )(*args)


def stem_conv_bn(x, w, scale, bias, stride, pad, relu=True):
    """7x7/s2 stem: im2col over the tiny raw channel dim so the MXU contracts
    K = kh*kw*cin (padded to 128) instead of a 3->128 zero-padded Cin."""
    kh, kw, cin, cout = w.shape
    N, H, W, C = x.shape
    OH = (H + 2 * pad - kh) // stride + 1
    OW = (W + 2 * pad - kw) // stride + 1
    K = kh * kw * cin
    Kp = _round_up(K, LANE)
    xp = jnp.pad(x, ((0, 0), (pad, pad), (pad, pad), (0, 0)))
    cols = []
    for di in range(kh):
        for dj in range(kw):
            cols.append(lax.slice(
                xp, (0, di, dj, 0),
                (N, di + (OH - 1) * stride + 1, dj + (OW - 1) * stride + 1, C),
                (1, stride, stride, 1)))
    if Kp > K:
        cols.append(jnp.zeros((N, OH, OW, Kp - K), x.dtype))
    patches = jnp.concatenate(cols, axis=-1)                 # (N, OH, OW, Kp)
    w2 = w.reshape(1, 1, K, cout)
    return conv_bn(patches, w2, scale, bias, stride=1, pad=0, relu=relu)


def maxpool2d(x, k=3, stride=2, pad=1):
    N, H, W, Cp = x.shape
    xs, OH, OW, Hps, Wps = _parity_planes_flat(x, k, k, stride, pad, -jnp.inf)
    tc = LANE
    grid = (N, Cp // tc)
    return pl.pallas_call(
        functools.partial(_maxpool_tap_kernel, k=k, stride=stride,
                          oh=OH, ow=OW, wps=Wps, hps=Hps),
        out_shape=jax.ShapeDtypeStruct((N, OH, OW, Cp), jnp.bfloat16),
        grid=grid,
        in_specs=[pl.BlockSpec((1, xs.shape[1], tc), lambda n, j: (n, 0, j))],
        out_specs=pl.BlockSpec((1, OH, OW, tc), lambda n, j: (n, 0, 0, j)),
        compiler_params=pltpu.CompilerParams(
            dimension_semantics=("parallel", "parallel"),
            vmem_limit_bytes=_VMEM_LIMIT),
    )(xs)


def avgpool_fc(x, fc_w, fc_b):
    N, H, W, Cp = x.shape
    cin, ncls = fc_w.shape
    Np = _round_up(N, 8)
    ncls_p = _round_up(ncls, LANE)                 # lane-dense class dimension
    xr = x.reshape(N, H * W, Cp).astype(jnp.bfloat16)
    xr = jnp.pad(xr, ((0, Np - N), (0, 0), (0, 0)))
    wp = jnp.zeros((Cp, ncls_p), jnp.bfloat16).at[:cin, :ncls].set(
        fc_w.astype(jnp.bfloat16))
    bp = jnp.zeros((1, ncls_p), jnp.float32).at[0, :ncls].set(fc_b)
    tn = LANE
    grid = (ncls_p // tn,)
    out = pl.pallas_call(
        _avgpool_fc_kernel,
        out_shape=jax.ShapeDtypeStruct((Np, ncls_p), jnp.float32),
        grid=grid,
        in_specs=[pl.BlockSpec((Np, H * W, Cp), lambda j: (0, 0, 0)),
                  pl.BlockSpec((Cp, tn), lambda j: (0, j)),
                  pl.BlockSpec((1, tn), lambda j: (0, j))],
        out_specs=pl.BlockSpec((Np, tn), lambda j: (0, j)),
        compiler_params=pltpu.CompilerParams(
            dimension_semantics=("parallel",),
            vmem_limit_bytes=_VMEM_LIMIT),
        cost_estimate=pl.CostEstimate(flops=int(2 * N * cin * ncls),
                                      transcendentals=0,
                                      bytes_accessed=int(xr.size * 2 + wp.size * 2
                                                         + Np * ncls_p * 4)),
    )(xr, wp, bp)
    return out[:N, :ncls]


# ---------------------------------------------------------------------------
# Parameter init (deterministic, mirrors the PyTorch __init__ semantics)
# ---------------------------------------------------------------------------
def _kaiming_conv(key, kh, kw, cin, cout):
    # kaiming_normal_(mode='fan_out', nonlinearity='relu')
    fan_out = kh * kw * cout
    std = math.sqrt(2.0 / fan_out)
    return std * jax.random.normal(key, (kh, kw, cin, cout), jnp.float32)


def _bn_affine(c):
    # BN init: weight=1, bias=0, running_mean=0, running_var=1 (eval), folded.
    gamma = jnp.ones((c,), jnp.float32)
    beta = jnp.zeros((c,), jnp.float32)
    rmean = jnp.zeros((c,), jnp.float32)
    rvar = jnp.ones((c,), jnp.float32)
    scale = gamma / jnp.sqrt(rvar + EPS)
    bias = beta - rmean * scale
    return scale, bias


def init_resnet_params(key, n_channels, n_classes, blocks, filters):
    params = {}
    key, k = jax.random.split(key)
    params["init_conv_w"] = _kaiming_conv(k, 7, 7, n_channels, filters[0])
    params["init_bn"] = _bn_affine(filters[0])

    params["blocks"] = []
    in_c = filters[0]
    for i, num_layers in enumerate(blocks):
        out_c = filters[i]
        downsampling = i != 0
        units = []
        for l in range(num_layers):
            stride = 2 if (downsampling and l == 0) else 1
            cin = in_c if l == 0 else out_c
            key, k1, k2, k3 = jax.random.split(key, 4)
            unit = {
                "w1": _kaiming_conv(k1, 3, 3, cin, out_c),
                "bn1": _bn_affine(out_c),
                "w2": _kaiming_conv(k2, 3, 3, out_c, out_c),
                "bn2": _bn_affine(out_c),
                "stride": stride,
            }
            if stride != 1 or cin != out_c:
                unit["wsc"] = _kaiming_conv(k3, 1, 1, cin, out_c)
                unit["bnsc"] = _bn_affine(out_c)
            units.append(unit)
        params["blocks"].append(units)
        in_c = out_c

    key, kw_, kb = jax.random.split(key, 3)
    bound = 1.0 / math.sqrt(filters[-1])
    params["fc_w"] = jax.random.uniform(kw_, (filters[-1], n_classes),
                                        jnp.float32, -bound, bound)
    params["fc_b"] = jax.random.uniform(kb, (n_classes,), jnp.float32,
                                        -bound, bound)
    return params


# ---------------------------------------------------------------------------
# Forward pass
# ---------------------------------------------------------------------------
def _basic_block(x, u):
    stride = u["stride"]
    if "wsc" in u:
        ssc, bsc = u["bnsc"]
        shortcut = conv_bn(x, u["wsc"], ssc, bsc, stride=stride, pad=0, relu=False)
    else:
        shortcut = x
    s1, b1 = u["bn1"]
    h = conv_bn(x, u["w1"], s1, b1, stride=stride, pad=1, relu=True)
    s2, b2 = u["bn2"]
    # second conv + BN + residual add + ReLU fused into one kernel epilogue
    return conv_bn(h, u["w2"], s2, b2, stride=1, pad=1, relu=True, residual=shortcut)


def resnet_forward(params, x_nchw):
    # NCHW (PyTorch) -> NHWC; the raw (tiny) channel dim is NOT lane-padded,
    # the stem im2col handles it.
    x = jnp.transpose(x_nchw, (0, 2, 3, 1)).astype(jnp.float32)

    # init_conv: Conv2d(k=7, s=2, p=3, bias=False) + BN + ReLU + MaxPool(3,2,1)
    s, b = params["init_bn"]
    x = stem_conv_bn(x, params["init_conv_w"], s, b, stride=2, pad=3, relu=True)
    x = maxpool2d(x, k=3, stride=2, pad=1)

    # encoder
    for units in params["blocks"]:
        for u in units:
            x = _basic_block(x, u)

    # global average pool + fc (fused); padded classes sliced off outside
    return avgpool_fc(x, params["fc_w"], params["fc_b"])


if __name__ == "__main__":
    key = jax.random.PRNGKey(0)
    kp, kx = jax.random.split(key)

    n_channels, n_classes = 4, 10
    blocks, filters = (1, 1), (8, 16)
    image_size = (16, 16)
    batch = 2

    params = init_resnet_params(kp, n_channels, n_classes, blocks, filters)
    x = jax.random.normal(kx, (batch, n_channels) + image_size, jnp.float32)

    out = resnet_forward(params, x)
    out = jax.block_until_ready(out)
    assert out.shape == (batch, n_classes), out.shape
    assert bool(jnp.all(jnp.isfinite(out)))
    print("KERNEL_OK")
</pallas_src>

<mosaic_0001>
module attributes {stable_mosaic.version = 11 : i64} {
  func.func @_conv_tap_kernel(%arg0: i32, %arg1: i32, %arg2: memref<1x64x256xbf16, #tpu.memory_space<vmem>>, %arg3: memref<1x256x128xbf16, #tpu.memory_space<vmem>>, %arg4: memref<1x128xf32, #tpu.memory_space<vmem>>, %arg5: memref<1x128xf32, #tpu.memory_space<vmem>>, %arg6: memref<1x8x8x128xbf16, #tpu.memory_space<vmem>>, %arg7: memref<64x128xf32, #tpu.memory_space<vmem>>) attributes {dimension_semantics = [#tpu.dimension_semantics<parallel>, #tpu.dimension_semantics<parallel>], iteration_bounds = array<i64: 2, 1>, scalar_prefetch = 0 : i64, scratch_operands = 1 : i64, tpu.core_type = #tpu.core_type<tc>, window_params = [{transform_indices = @transform_0, window_bounds = array<i64: 1, 64, 256>}, {transform_indices = @transform_1, window_bounds = array<i64: 1, 256, 128>}, {transform_indices = @transform_2, window_bounds = array<i64: 1, 128>}, {transform_indices = @transform_3, window_bounds = array<i64: 1, 128>}, {transform_indices = @transform_4, window_bounds = array<i64: 1, 8, 8, 128>}]} {
    %c0 = arith.constant 0 : index
    %c0_0 = arith.constant 0 : index
    %0 = vector.load %arg4[%c0, %c0_0] : memref<1x128xf32, #tpu.memory_space<vmem>>, vector<1x128xf32>
    %c0_1 = arith.constant 0 : index
    %c0_2 = arith.constant 0 : index
    %1 = vector.load %arg5[%c0_1, %c0_2] : memref<1x128xf32, #tpu.memory_space<vmem>>, vector<1x128xf32>
    %c0_i32 = arith.constant 0 : i32
    %c8_i32 = arith.constant 8 : i32
    %2 = arith.muli %c0_i32, %c8_i32 : i32
    %c0_i32_3 = arith.constant 0 : i32
    %3 = arith.addi %c0_i32_3, %2 : i32
    %c8_i32_4 = arith.constant 8 : i32
    %4 = arith.muli %3, %c8_i32_4 : i32
    %c0_i32_5 = arith.constant 0 : i32
    %5 = arith.addi %4, %c0_i32_5 : i32
    %c0_6 = arith.constant 0 : index
    %6 = arith.index_cast %5 : i32 to index
    %c0_7 = arith.constant 0 : index
    %7 = vector.load %arg2[%c0_6, %6, %c0_7] : memref<1x64x256xbf16, #tpu.memory_space<vmem>>, vector<1x64x256xbf16>
    %8 = vector.shape_cast %7 : vector<1x64x256xbf16> to vector<64x256xbf16>
    %c0_8 = arith.constant 0 : index
    %c0_9 = arith.constant 0 : index
    %c0_10 = arith.constant 0 : index
    %9 = vector.load %arg3[%c0_8, %c0_9, %c0_10] : memref<1x256x128xbf16, #tpu.memory_space<vmem>>, vector<1x256x128xbf16>
    %10 = vector.shape_cast %9 : vector<1x256x128xbf16> to vector<256x128xbf16>
    %cst = arith.constant dense<0.000000e+00> : vector<64x128xf32>
    %11 = tpu.matmul %8, %10, %cst {dimension_numbers = #tpu.dot_dimension_numbers<[1], [0], [0], [1], [0, 0, 1, 1], [], []>} : vector<64x256xbf16>, vector<256x128xbf16>, vector<64x128xf32> -> vector<64x128xf32>
    %c0_11 = arith.constant 0 : index
    %c0_12 = arith.constant 0 : index
    %12 = vector.load %arg7[%c0_11, %c0_12] : memref<64x128xf32, #tpu.memory_space<vmem>>, vector<64x128xf32>
    tpu.vector_store %arg7[%c0_11, %c0_12], %11 {strides = array<i32>} : memref<64x128xf32, #tpu.memory_space<vmem>>, vector<64x128xf32>,
    %c0_13 = arith.constant 0 : index
    %c0_14 = arith.constant 0 : index
    %13 = vector.load %arg7[%c0_13, %c0_14] : memref<64x128xf32, #tpu.memory_space<vmem>>, vector<8x128xf32>
    %14 = vector.broadcast %0 : vector<1x128xf32> to vector<8x128xf32>
    %15 = arith.mulf %13, %14 : vector<8x128xf32>
    %16 = vector.broadcast %1 : vector<1x128xf32> to vector<8x128xf32>
    %17 = arith.addf %15, %16 : vector<8x128xf32>
    %cst_15 = arith.constant 0.000000e+00 : f32
    %18 = vector.broadcast %cst_15 : f32 to vector<8x128xf32>
    %19 = arith.maximumf %17, %18 : vector<8x128xf32>
    %20 = arith.truncf %19 : vector<8x128xf32> to vector<8x128xbf16>
    %c0_i32_16 = arith.constant 0 : i32
    %21 = arith.addi %2, %c0_i32_16 : i32
    %c0_17 = arith.constant 0 : index
    %22 = arith.index_cast %21 : i32 to index
    %c0_18 = arith.constant 0 : index
    %c0_19 = arith.constant 0 : index
    %23 = vector.load %arg6[%c0_17, %22, %c0_18, %c0_19] : memref<1x8x8x128xbf16, #tpu.memory_space<vmem>>, vector<1x1x8x128xbf16>
    %24 = vector.shape_cast %23 : vector<1x1x8x128xbf16> to vector<8x128xbf16>
    %25 = vector.shape_cast %20 : vector<8x128xbf16> to vector<1x1x8x128xbf16>
    tpu.vector_store %arg6[%c0_17, %22, %c0_18, %c0_19], %25 {strides = array<i32>} : memref<1x8x8x128xbf16, #tpu.memory_space<vmem>>, vector<1x1x8x128xbf16>,
    %c8 = arith.constant 8 : index
    %c0_20 = arith.constant 0 : index
    %26 = vector.load %arg7[%c8, %c0_20] : memref<64x128xf32, #tpu.memory_space<vmem>>, vector<8x128xf32>
    %27 = vector.broadcast %0 : vector<1x128xf32> to vector<8x128xf32>
    %28 = arith.mulf %26, %27 : vector<8x128xf32>
    %29 = vector.broadcast %1 : vector<1x128xf32> to vector<8x128xf32>
    %30 = arith.addf %28, %29 : vector<8x128xf32>
    %cst_21 = arith.constant 0.000000e+00 : f32
    %31 = vector.broadcast %cst_21 : f32 to vector<8x128xf32>
    %32 = arith.maximumf %30, %31 : vector<8x128xf32>
    %33 = arith.truncf %32 : vector<8x128xf32> to vector<8x128xbf16>
    %c1_i32 = arith.constant 1 : i32
    %34 = arith.addi %2, %c1_i32 : i32
    %c0_22 = arith.constant 0 : index
    %35 = arith.index_cast %34 : i32 to index
    %c0_23 = arith.constant 0 : index
    %c0_24 = arith.constant 0 : index
    %36 = vector.load %arg6[%c0_22, %35, %c0_23, %c0_24] : memref<1x8x8x128xbf16, #tpu.memory_space<vmem>>, vector<1x1x8x128xbf16>
    %37 = vector.shape_cast %36 : vector<1x1x8x128xbf16> to vector<8x128xbf16>
    %38 = vector.shape_cast %33 : vector<8x128xbf16> to vector<1x1x8x128xbf16>
    tpu.vector_store %arg6[%c0_22, %35, %c0_23, %c0_24], %38 {strides = array<i32>} : memref<1x8x8x128xbf16, #tpu.memory_space<vmem>>, vector<1x1x8x128xbf16>,
    %c16 = arith.constant 16 : index
    %c0_25 = arith.constant 0 : index
    %39 = vector.load %arg7[%c16, %c0_25] : memref<64x128xf32, #tpu.memory_space<vmem>>, vector<8x128xf32>
    %40 = vector.broadcast %0 : vector<1x128xf32> to vector<8x128xf32>
    %41 = arith.mulf %39, %40 : vector<8x128xf32>
    %42 = vector.broadcast %1 : vector<1x128xf32> to vector<8x128xf32>
    %43 = arith.addf %41, %42 : vector<8x128xf32>
    %cst_26 = arith.constant 0.000000e+00 : f32
    %44 = vector.broadcast %cst_26 : f32 to vector<8x128xf32>
    %45 = arith.maximumf %43, %44 : vector<8x128xf32>
    %46 = arith.truncf %45 : vector<8x128xf32> to vector<8x128xbf16>
    %c2_i32 = arith.constant 2 : i32
    %47 = arith.addi %2, %c2_i32 : i32
    %c0_27 = arith.constant 0 : index
    %48 = arith.index_cast %47 : i32 to index
    %c0_28 = arith.constant 0 : index
    %c0_29 = arith.constant 0 : index
    %49 = vector.load %arg6[%c0_27, %48, %c0_28, %c0_29] : memref<1x8x8x128xbf16, #tpu.memory_space<vmem>>, vector<1x1x8x128xbf16>
    %50 = vector.shape_cast %49 : vector<1x1x8x128xbf16> to vector<8x128xbf16>
    %51 = vector.shape_cast %46 : vector<8x128xbf16> to vector<1x1x8x128xbf16>
    tpu.vector_store %arg6[%c0_27, %48, %c0_28, %c0_29], %51 {strides = array<i32>} : memref<1x8x8x128xbf16, #tpu.memory_space<vmem>>, vector<1x1x8x128xbf16>,
    %c24 = arith.constant 24 : index
    %c0_30 = arith.constant 0 : index
    %52 = vector.load %arg7[%c24, %c0_30] : memref<64x128xf32, #tpu.memory_space<vmem>>, vector<8x128xf32>
    %53 = vector.broadcast %0 : vector<1x128xf32> to vector<8x128xf32>
    %54 = arith.mulf %52, %53 : vector<8x128xf32>
    %55 = vector.broadcast %1 : vector<1x128xf32> to vector<8x128xf32>
    %56 = arith.addf %54, %55 : vector<8x128xf32>
    %cst_31 = arith.constant 0.000000e+00 : f32
    %57 = vector.broadcast %cst_31 : f32 to vector<8x128xf32>
    %58 = arith.maximumf %56, %57 : vector<8x128xf32>
    %59 = arith.truncf %58 : vector<8x128xf32> to vector<8x128xbf16>
    %c3_i32 = arith.constant 3 : i32
    %60 = arith.addi %2, %c3_i32 : i32
    %c0_32 = arith.constant 0 : index
    %61 = arith.index_cast %60 : i32 to index
    %c0_33 = arith.constant 0 : index
    %c0_34 = arith.constant 0 : index
    %62 = vector.load %arg6[%c0_32, %61, %c0_33, %c0_34] : memref<1x8x8x128xbf16, #tpu.memory_space<vmem>>, vector<1x1x8x128xbf16>
    %63 = vector.shape_cast %62 : vector<1x1x8x128xbf16> to vector<8x128xbf16>
    %64 = vector.shape_cast %59 : vector<8x128xbf16> to vector<1x1x8x128xbf16>
    tpu.vector_store %arg6[%c0_32, %61, %c0_33, %c0_34], %64 {strides = array<i32>} : memref<1x8x8x128xbf16, #tpu.memory_space<vmem>>, vector<1x1x8x128xbf16>,
    %c32 = arith.constant 32 : index
    %c0_35 = arith.constant 0 : index
    %65 = vector.load %arg7[%c32, %c0_35] : memref<64x128xf32, #tpu.memory_space<vmem>>, vector<8x128xf32>
    %66 = vector.broadcast %0 : vector<1x128xf32> to vector<8x128xf32>
    %67 = arith.mulf %65, %66 : vector<8x128xf32>
    %68 = vector.broadcast %1 : vector<1x128xf32> to vector<8x128xf32>
    %69 = arith.addf %67, %68 : vector<8x128xf32>
    %cst_36 = arith.constant 0.000000e+00 : f32
    %70 = vector.broadcast %cst_36 : f32 to vector<8x128xf32>
    %71 = arith.maximumf %69, %70 : vector<8x128xf32>
    %72 = arith.truncf %71 : vector<8x128xf32> to vector<8x128xbf16>
    %c4_i32 = arith.constant 4 : i32
    %73 = arith.addi %2, %c4_i32 : i32
    %c0_37 = arith.constant 0 : index
    %74 = arith.index_cast %73 : i32 to index
    %c0_38 = arith.constant 0 : index
    %c0_39 = arith.constant 0 : index
    %75 = vector.load %arg6[%c0_37, %74, %c0_38, %c0_39] : memref<1x8x8x128xbf16, #tpu.memory_space<vmem>>, vector<1x1x8x128xbf16>
    %76 = vector.shape_cast %75 : vector<1x1x8x128xbf16> to vector<8x128xbf16>
    %77 = vector.shape_cast %72 : vector<8x128xbf16> to vector<1x1x8x128xbf16>
    tpu.vector_store %arg6[%c0_37, %74, %c0_38, %c0_39], %77 {strides = array<i32>} : memref<1x8x8x128xbf16, #tpu.memory_space<vmem>>, vector<1x1x8x128xbf16>,
    %c40 = arith.constant 40 : index
    %c0_40 = arith.constant 0 : index
    %78 = vector.load %arg7[%c40, %c0_40] : memref<64x128xf32, #tpu.memory_space<vmem>>, vector<8x128xf32>
    %79 = vector.broadcast %0 : vector<1x128xf32> to vector<8x128xf32>
    %80 = arith.mulf %78, %79 : vector<8x128xf32>
    %81 = vector.broadcast %1 : vector<1x128xf32> to vector<8x128xf32>
    %82 = arith.addf %80, %81 : vector<8x128xf32>
    %cst_41 = arith.constant 0.000000e+00 : f32
    %83 = vector.broadcast %cst_41 : f32 to vector<8x128xf32>
    %84 = arith.maximumf %82, %83 : vector<8x128xf32>
    %85 = arith.truncf %84 : vector<8x128xf32> to vector<8x128xbf16>
    %c5_i32 = arith.constant 5 : i32
    %86 = arith.addi %2, %c5_i32 : i32
    %c0_42 = arith.constant 0 : index
    %87 = arith.index_cast %86 : i32 to index
    %c0_43 = arith.constant 0 : index
    %c0_44 = arith.constant 0 : index
    %88 = vector.load %arg6[%c0_42, %87, %c0_43, %c0_44] : memref<1x8x8x128xbf16, #tpu.memory_space<vmem>>, vector<1x1x8x128xbf16>
    %89 = vector.shape_cast %88 : vector<1x1x8x128xbf16> to vector<8x128xbf16>
    %90 = vector.shape_cast %85 : vector<8x128xbf16> to vector<1x1x8x128xbf16>
    tpu.vector_store %arg6[%c0_42, %87, %c0_43, %c0_44], %90 {strides = array<i32>} : memref<1x8x8x128xbf16, #tpu.memory_space<vmem>>, vector<1x1x8x128xbf16>,
    %c48 = arith.constant 48 : index
    %c0_45 = arith.constant 0 : index
    %91 = vector.load %arg7[%c48, %c0_45] : memref<64x128xf32, #tpu.memory_space<vmem>>, vector<8x128xf32>
    %92 = vector.broadcast %0 : vector<1x128xf32> to vector<8x128xf32>
    %93 = arith.mulf %91, %92 : vector<8x128xf32>
    %94 = vector.broadcast %1 : vector<1x128xf32> to vector<8x128xf32>
    %95 = arith.addf %93, %94 : vector<8x128xf32>
    %cst_46 = arith.constant 0.000000e+00 : f32
    %96 = vector.broadcast %cst_46 : f32 to vector<8x128xf32>
    %97 = arith.maximumf %95, %96 : vector<8x128xf32>
    %98 = arith.truncf %97 : vector<8x128xf32> to vector<8x128xbf16>
    %c6_i32 = arith.constant 6 : i32
    %99 = arith.addi %2, %c6_i32 : i32
    %c0_47 = arith.constant 0 : index
    %100 = arith.index_cast %99 : i32 to index
    %c0_48 = arith.constant 0 : index
    %c0_49 = arith.constant 0 : index
    %101 = vector.load %arg6[%c0_47, %100, %c0_48, %c0_49] : memref<1x8x8x128xbf16, #tpu.memory_space<vmem>>, vector<1x1x8x128xbf16>
    %102 = vector.shape_cast %101 : vector<1x1x8x128xbf16> to vector<8x128xbf16>
    %103 = vector.shape_cast %98 : vector<8x128xbf16> to vector<1x1x8x128xbf16>
    tpu.vector_store %arg6[%c0_47, %100, %c0_48, %c0_49], %103 {strides = array<i32>} : memref<1x8x8x128xbf16, #tpu.memory_space<vmem>>, vector<1x1x8x128xbf16>,
    %c56 = arith.constant 56 : index
    %c0_50 = arith.constant 0 : index
    %104 = vector.load %arg7[%c56, %c0_50] : memref<64x128xf32, #tpu.memory_space<vmem>>, vector<8x128xf32>
    %105 = vector.broadcast %0 : vector<1x128xf32> to vector<8x128xf32>
    %106 = arith.mulf %104, %105 : vector<8x128xf32>
    %107 = vector.broadcast %1 : vector<1x128xf32> to vector<8x128xf32>
    %108 = arith.addf %106, %107 : vector<8x128xf32>
    %cst_51 = arith.constant 0.000000e+00 : f32
    %109 = vector.broadcast %cst_51 : f32 to vector<8x128xf32>
    %110 = arith.maximumf %108, %109 : vector<8x128xf32>
    %111 = arith.truncf %110 : vector<8x128xf32> to vector<8x128xbf16>
    %c7_i32 = arith.constant 7 : i32
    %112 = arith.addi %2, %c7_i32 : i32
    %c0_52 = arith.constant 0 : index
    %113 = arith.index_cast %112 : i32 to index
    %c0_53 = arith.constant 0 : index
    %c0_54 = arith.constant 0 : index
    %114 = vector.load %arg6[%c0_52, %113, %c0_53, %c0_54] : memref<1x8x8x128xbf16, #tpu.memory_space<vmem>>, vector<1x1x8x128xbf16>
    %115 = vector.shape_cast %114 : vector<1x1x8x128xbf16> to vector<8x128xbf16>
    %116 = vector.shape_cast %111 : vector<8x128xbf16> to vector<1x1x8x128xbf16>
    tpu.vector_store %arg6[%c0_52, %113, %c0_53, %c0_54], %116 {strides = array<i32>} : memref<1x8x8x128xbf16, #tpu.memory_space<vmem>>, vector<1x1x8x128xbf16>,
    %c1_i32_55 = arith.constant 1 : i32
    return
  }
  func.func @transform_0(%arg0: i32, %arg1: i32) -> (i32, i32, i32) {
    %c0_i32 = arith.constant 0 : i32
    %c0_i32_0 = arith.constant 0 : i32
    %c0_i32_1 = arith.constant 0 : i32
    return %arg0, %c0_i32, %c0_i32_0 : i32, i32, i32
  }
  func.func @transform_1(%arg0: i32, %arg1: i32) -> (i32, i32, i32) {
    %c0_i32 = arith.constant 0 : i32
    %c0_i32_0 = arith.constant 0 : i32
    %c0_i32_1 = arith.constant 0 : i32
    return %c0_i32, %c0_i32_0, %arg1 : i32, i32, i32
  }
  func.func @transform_2(%arg0: i32, %arg1: i32) -> (i32, i32) {
    %c0_i32 = arith.constant 0 : i32
    %c0_i32_0 = arith.constant 0 : i32
    return %c0_i32, %arg1 : i32, i32
  }
  func.func @transform_3(%arg0: i32, %arg1: i32) -> (i32, i32) {
    %c0_i32 = arith.constant 0 : i32
    %c0_i32_0 = arith.constant 0 : i32
    return %c0_i32, %arg1 : i32, i32
  }
  func.func @transform_4(%arg0: i32, %arg1: i32) -> (i32, i32, i32, i32) {
    %c0_i32 = arith.constant 0 : i32
    %c0_i32_0 = arith.constant 0 : i32
    %c0_i32_1 = arith.constant 0 : i32
    return %arg0, %c0_i32, %c0_i32_0, %arg1 : i32, i32, i32, i32
  }
}

</mosaic_0001>

<llo_original>
// kernel: tpu_custom_call.1
$region0: #{tpu_custom_call.1}
  #allocation0 [shape = 'u32[]', space=smem, size = 0x4, offset = 0x4, fixed_abs, tag = 'smem constant byte address 0x4 - core index']
  #allocation1 [shape = 'u32[144,128]{1,0:T(1,128)}', space=vmem, size = 0x12000, scoped, tag = 'internal scratch']
  #allocation2 [shape = 'f32[64,128]{1,0:T(8,128)}', space=vmem, size = 0x8000, scoped, tag = 'scratch operand']
  %s0 = inlined_call_operand.hbm [shape: bf16[2,64,256], index: 0, kind: input, shape index: {}]
  %s1 = inlined_call_operand.hbm [shape: bf16[1,256,128], index: 1, kind: input, shape index: {}]
  %s2 = inlined_call_operand.vmem [shape: f32[1,128], index: 2, kind: input, shape index: {}]
  %s3 = inlined_call_operand.vmem [shape: f32[1,128], index: 3, kind: input, shape index: {}]
  %s4 = inlined_call_operand.hbm [shape: bf16[2,8,8,128], index: 4, kind: output, shape index: {}]
  %s5 = sld [smem:[#allocation0]]
  $region57: #{tpu_custom_call.1} parent=0
    _
  %s7 = ssub.s32 1, %s5
  %s8 = scalar_select 0, %s7, %s5
  $region1: #{tpu_custom_call.1} parent=0
    #allocation3 [shape = 'u8[65536]{0}', space=vmem, size = 0x10000, scoped, tag = 'input window, operand 0']
    #allocation4 [shape = 's32[2]{0}', space=sflag, size = 0x8, scoped, tag = 'scoped memory for tpu_custom_call.1']
    #allocation5 [shape = 's32[2]{0}', space=sflag, size = 0x8, scoped, tag = 'scoped memory for tpu_custom_call.1']
    #allocation6 [shape = 'u8[65536]{0}', space=vmem, size = 0x10000, scoped, tag = 'input window, operand 1, single buffered']
    #allocation7 [shape = 's32[1]{0}', space=sflag, size = 0x4, scoped, tag = 'scoped memory for tpu_custom_call.1']
    #allocation8 [shape = 'u8[32768]{0}', space=vmem, size = 0x8000, scoped, tag = 'output window, operand 0']
    %9 = vsyncpa [#allocation4], 0
    %s10 = scalar_lea.sflag [#allocation4], 1
    %11 = vsyncpa %s10, 0
    %12 = vsyncpa [#allocation7], 0
    %13 = vsyncpa [#allocation5], 0
    %s14 = scalar_lea.sflag [#allocation5], 1
    %15 = vsyncpa %s14, 0
    loop: start=0, step=1, limit=4
    $region2: #{tpu_custom_call.1} parent=1 // loop_pre_header
      _
    $region3: #{tpu_custom_call.1} parent=1 // loop_header
      %s17 = sphi 0, %s21
      %p18 = scmp.ge.s32.totalorder %s17, 4
      %s24 = sphi 0, %s36
      %s25 = sphi 0, %s32
      %s26 = sphi 0, %s24
      %s27 = sphi 0, %s25
      %s28 = sphi 0, %s26
      %s29 = sphi 0, %s27
      %s39 = sphi 0, %s41
      %s42 = sphi 0, %s39
      %s43 = sphi 0, %s42
      %s59 = sphi 0, %s43
      %s65 = sphi 0, %s67
      %s68 = sphi 0, %s65
      %s69 = sphi 0, %s68
      %s85 = sphi 0, %s69
      %s91 = sphi 0, %s93
      %s94 = sphi 0, %s91
      %s95 = sphi 0, %s94
      %s111 = sphi 0, %s95
      %s117 = sphi 0, %s119
      %s120 = sphi 0, %s117
      %s121 = sphi 0, %s120
      %s137 = sphi 0, %s121
      %s145 = sphi 0, %s147
      %s148 = sphi 0, %s145
      %s149 = sphi 0, %s148
      %s165 = sphi 0, %s149
    $region4: #{tpu_custom_call.1} parent=1 // loop_header_branch
      %20 = sbr.rel (%p18) target = $region8
    $region5: #{tpu_custom_call.1} parent=1 // loop_body
      %s22 = ssub.s32 %s17, 1
      %s23 = ssub.s32 %s17, 2
      %s30 = sadd.s32 1, %s25
      %p31 = scmp.ge.s32.totalorder %s30, 1
      %s32 = scalar_select %p31, 0, %s30
      %s33 = sadd.s32 1, %s24
      %s34 = scalar_select %p31, %s33, %s24
      %p35 = scmp.ge.s32.totalorder %s34, 2
      %s36 = scalar_select %p35, 0, %s34
      %s37 = ssub.s32 %s24, %s36
      %p38 = scmp.eq.s32.totalorder %s37, 0
      %s40 = sadd.s32 %s39, 1
      %s41 = scalar_select %p38, %s39, %s40
      %p44 = pneg %p38
      %p45 = scmp.eq.s32.totalorder %s17, 1
      %p46 = por %p44, %p45
      %p47 = scmp.ne.s32.totalorder %s39, %s42
      %p48 = scmp.eq.s32.totalorder %s17, 0
      %p49 = por %p47, %p48
      %p50 = scmp.ne.s32.totalorder %s39, %s42
      %p51 = scmp.eq.s32.totalorder %s22, 1
      %p52 = por %p50, %p51
      %p53 = scmp.ne.s32.totalorder %s42, %s43
      %p54 = scmp.eq.s32.totalorder %s22, 0
      %p55 = por %p53, %p54
      %p56 = scmp.ne.s32.totalorder %s42, %s43
      %p57 = scmp.eq.s32.totalorder %s23, 1
      %p58 = por %p56, %p57
      %p60 = scmp.ne.s32.totalorder %s43, %s59
      %p61 = scmp.eq.s32.totalorder %s23, 0
      %p62 = por %p60, %p61
      %s63 = ssub.s32 %s25, %s32
      %p64 = scmp.eq.s32.totalorder %s63, 0
      %s66 = sadd.s32 %s65, 1
      %s67 = scalar_select %p64, %s65, %s66
      %p70 = pneg %p64
      %p71 = scmp.eq.s32.totalorder %s17, 1
      %p72 = por %p70, %p71
      %p73 = scmp.ne.s32.totalorder %s65, %s68
      %p74 = scmp.eq.s32.totalorder %s17, 0
      %p75 = por %p73, %p74
      %p76 = scmp.ne.s32.totalorder %s65, %s68
      %p77 = scmp.eq.s32.totalorder %s22, 1
      %p78 = por %p76, %p77
      %p79 = scmp.ne.s32.totalorder %s68, %s69
      %p80 = scmp.eq.s32.totalorder %s22, 0
      %p81 = por %p79, %p80
      %p82 = scmp.ne.s32.totalorder %s68, %s69
      %p83 = scmp.eq.s32.totalorder %s23, 1
      %p84 = por %p82, %p83
      %p86 = scmp.ne.s32.totalorder %s69, %s85
      %p87 = scmp.eq.s32.totalorder %s23, 0
      %p88 = por %p86, %p87
      %s89 = ssub.s32 %s25, %s32
      %p90 = scmp.eq.s32.totalorder %s89, 0
      %s92 = sadd.s32 %s91, 1
      %s93 = scalar_select %p90, %s91, %s92
      %p96 = pneg %p90
      %p97 = scmp.eq.s32.totalorder %s17, 1
      %p98 = por %p96, %p97
      %p99 = scmp.ne.s32.totalorder %s91, %s94
      %p100 = scmp.eq.s32.totalorder %s17, 0
      %p101 = por %p99, %p100
      %p102 = scmp.ne.s32.totalorder %s91, %s94
      %p103 = scmp.eq.s32.totalorder %s22, 1
      %p104 = por %p102, %p103
      %p105 = scmp.ne.s32.totalorder %s94, %s95
      %p106 = scmp.eq.s32.totalorder %s22, 0
      %p107 = por %p105, %p106
      %p108 = scmp.ne.s32.totalorder %s94, %s95
      %p109 = scmp.eq.s32.totalorder %s23, 1
      %p110 = por %p108, %p109
      %p112 = scmp.ne.s32.totalorder %s95, %s111
      %p113 = scmp.eq.s32.totalorder %s23, 0
      %p114 = por %p112, %p113
      %s115 = ssub.s32 %s25, %s32
      %p116 = scmp.eq.s32.totalorder %s115, 0
      %s118 = sadd.s32 %s117, 1
      %s119 = scalar_select %p116, %s117, %s118
      %p122 = pneg %p116
      %p123 = scmp.eq.s32.totalorder %s17, 1
      %p124 = por %p122, %p123
      %p125 = scmp.ne.s32.totalorder %s117, %s120
      %p126 = scmp.eq.s32.totalorder %s17, 0
      %p127 = por %p125, %p126
      %p128 = scmp.ne.s32.totalorder %s117, %s120
      %p129 = scmp.eq.s32.totalorder %s22, 1
      %p130 = por %p128, %p129
      %p131 = scmp.ne.s32.totalorder %s120, %s121
      %p132 = scmp.eq.s32.totalorder %s22, 0
      %p133 = por %p131, %p132
      %p134 = scmp.ne.s32.totalorder %s120, %s121
      %p135 = scmp.eq.s32.totalorder %s23, 1
      %p136 = por %p134, %p135
      %p138 = scmp.ne.s32.totalorder %s121, %s137
      %p139 = scmp.eq.s32.totalorder %s23, 0
      %p140 = por %p138, %p139
      %s141 = ssub.s32 %s24, %s36
      %s142 = ssub.s32 %s25, %s32
      %s143 = sor.u32 %s141, %s142
      %p144 = scmp.eq.s32.totalorder %s143, 0
      %s146 = sadd.s32 %s145, 1
      %s147 = scalar_select %p144, %s145, %s146
      %p150 = pneg %p144
      %p151 = scmp.eq.s32.totalorder %s17, 1
      %p152 = por %p150, %p151
      %p153 = scmp.ne.s32.totalorder %s145, %s148
      %p154 = scmp.eq.s32.totalorder %s17, 0
      %p155 = por %p153, %p154
      %p156 = scmp.ne.s32.totalorder %s145, %s148
      %p157 = scmp.eq.s32.totalorder %s22, 1
      %p158 = por %p156, %p157
      %p159 = scmp.ne.s32.totalorder %s148, %s149
      %p160 = scmp.eq.s32.totalorder %s22, 0
      %p161 = por %p159, %p160
      %p162 = scmp.ne.s32.totalorder %s148, %s149
      %p163 = scmp.eq.s32.totalorder %s23, 1
      %p164 = por %p162, %p163
      %p166 = scmp.ne.s32.totalorder %s149, %s165
      %p167 = scmp.eq.s32.totalorder %s23, 0
      %p168 = por %p166, %p167
      %p169 = scmp.le.s32.totalorder 1, %s17
      %p170 = scmp.lt.s32.totalorder %s17, 3
      %p171 = pnand %p169, %p170
      %p172 = pneg %p171
      // Predicated region
      $region9: #{tpu_custom_call.1} parent=5 // pred_check
        _
      $region10: #{tpu_custom_call.1} parent=5 // pred_check_branch
        %174 = sbr.rel (%p171) target = $region12
      $region11: #{tpu_custom_call.1} parent=5 // pred_region
        %s175 = ssub.s32 %s17, 1
        // Predicated region
        $region13: #{tpu_custom_call.1} parent=11 // pred_check
          %p176 = pneg %p81
        $region14: #{tpu_custom_call.1} parent=11 // pred_check_branch
          %178 = sbr.rel (%p176) target = $region16
        $region15: #{tpu_custom_call.1} parent=11 // pred_region
          %s180 = ssub.s32 2048, 2048
          %181 = vsyncadd [#allocation7], %s180
          %s182 = smul.addr %s27, 64
          %s183 = scalar_lea.hbm %s1, %s182
          %s184 = sshll.u32 [#allocation6], 4
          %s185 = int_to_ptr.vmem [resolvable:$true] %s184
          %190 = dma.hbm_to_vmem [thread:$0]  %s183, 2048, %s185, [#allocation7], 64, 64, 4
        $region16: #{tpu_custom_call.1} parent=11 // pred_fallthru
          _
        // Predicated region
        $region17: #{tpu_custom_call.1} parent=11 // pred_check
          %p191 = pneg %p107
        $region18: #{tpu_custom_call.1} parent=11 // pred_check_branch
          %193 = sbr.rel (%p191) target = $region20
        $region19: #{tpu_custom_call.1} parent=11 // pred_region
          %p194 = scmp.lt.s32.totalorder %s27, 0
          %s195 = scalar_select %p194, %s27, 0
          %s196 = scalar_lea.vmem %s2, %s195
        $region20: #{tpu_custom_call.1} parent=11 // pred_fallthru
          _
        // Predicated region
        $region21: #{tpu_custom_call.1} parent=11 // pred_check
          %p197 = pneg %p133
        $region22: #{tpu_custom_call.1} parent=11 // pred_check_branch
          %199 = sbr.rel (%p197) target = $region24
        $region23: #{tpu_custom_call.1} parent=11 // pred_region
          %p200 = scmp.lt.s32.totalorder %s27, 0
          %s201 = scalar_select %p200, %s27, 0
          %s202 = scalar_lea.vmem %s3, %s201
        $region24: #{tpu_custom_call.1} parent=11 // pred_fallthru
          _
      $region12: #{tpu_custom_call.1} parent=5 // pred_fallthru
        _
      %p203 = scmp.lt.s32.totalorder %s17, 2
      // Predicated region
      $region25: #{tpu_custom_call.1} parent=5 // pred_check
        %p204 = pneg %p203
      $region26: #{tpu_custom_call.1} parent=5 // pred_check_branch
        %206 = sbr.rel (%p204) target = $region28
      $region27: #{tpu_custom_call.1} parent=5 // pred_region
        // Predicated region
        $region29: #{tpu_custom_call.1} parent=27 // pred_check
          %p207 = pneg %p49
        $region30: #{tpu_custom_call.1} parent=27 // pred_check_branch
          %209 = sbr.rel (%p207) target = $region32
        $region31: #{tpu_custom_call.1} parent=27 // pred_region
          %s210 = sand.u32 %s39, 1
          %s211 = scalar_lea.sflag [#allocation4], %s210
          %s212 = sand.u32 %s39, 1
          %s213 = smul.addr %s212, 64
          %s214 = scalar_lea.vmem [#allocation3], %s213
          %s216 = ssub.s32 1024, 1024
          %217 = vsyncadd %s211, %s216
          %s218 = smul.addr %s24, 16
          %s219 = smul.addr %s218, 64
          %s220 = scalar_lea.hbm %s0, %s219
          %s221 = sshll.u32 %s214, 4
          %s222 = int_to_ptr.vmem [resolvable:$true] %s221
          %227 = dma.hbm_to_vmem [thread:$0]  %s220, 1024, %s222, %s211, 128, 128, 8
        $region32: #{tpu_custom_call.1} parent=27 // pred_fallthru
          _
      $region28: #{tpu_custom_call.1} parent=5 // pred_fallthru
        _
      %p228 = scmp.le.s32.totalorder 1, %s17
      %p229 = scmp.lt.s32.totalorder %s17, 3
      %p230 = pnand %p228, %p229
      %p231 = pneg %p230
      // Predicated region
      $region33: #{tpu_custom_call.1} parent=5 // pred_check
        _
      $region34: #{tpu_custom_call.1} parent=5 // pred_check_branch
        %233 = sbr.rel (%p230) target = $region36
      $region35: #{tpu_custom_call.1} parent=5 // pred_region
        %s234 = ssub.s32 %s17, 1
        %s235 = sand.u32 %s42, 1
        %s236 = scalar_lea.sflag [#allocation4], %s235
        %s237 = sand.u32 %s42, 1
        %s238 = smul.addr %s237, 64
        %s239 = scalar_lea.vmem [#allocation3], %s238
        // Predicated region
        $region37: #{tpu_custom_call.1} parent=35 // pred_check
          %p240 = pneg %p55
        $region38: #{tpu_custom_call.1} parent=35 // pred_check_branch
          %242 = sbr.rel (%p240) target = $region40
        $region39: #{tpu_custom_call.1} parent=35 // pred_region
          %243 = dma.done %s236, 1024
        $region40: #{tpu_custom_call.1} parent=35 // pred_fallthru
          _
        // Predicated region
        $region41: #{tpu_custom_call.1} parent=35 // pred_check
          %p244 = pneg %p81
        $region42: #{tpu_custom_call.1} parent=35 // pred_check_branch
          %246 = sbr.rel (%p244) target = $region44
        $region43: #{tpu_custom_call.1} parent=35 // pred_region
          %247 = dma.done [#allocation7], 2048
        $region44: #{tpu_custom_call.1} parent=35 // pred_fallthru
          _
        %s248 = sand.u32 %s42, 1
        %s249 = scalar_lea.sflag [#allocation4], %s248
        %s250 = sand.u32 %s42, 1
        %s251 = smul.addr %s250, 64
        %s252 = scalar_lea.vmem [#allocation3], %s251
        %p253 = pneg %p55
        %p254 = pneg %p52
        %p255 = pneg %p81
        %p256 = pneg %p78
        %p257 = scmp.lt.s32.totalorder %s27, 0
        %s258 = scalar_select %p257, %s27, 0
        %s259 = scalar_lea.vmem %s2, %s258
        %p260 = pneg %p107
        %p261 = pneg %p104
        %p262 = scmp.lt.s32.totalorder %s27, 0
        %s263 = scalar_select %p262, %s27, 0
        %s264 = scalar_lea.vmem %s3, %s263
        %p265 = pneg %p133
        %p266 = pneg %p130
        %p267 = pneg %p161
        %p268 = pneg %p158
        %s269 = sand.u32 %s148, 1
        %s270 = scalar_lea.sflag [#allocation5], %s269
        %s271 = sand.u32 %s148, 1
        %s272 = smul.addr %s271, 32
        %s273 = scalar_lea.vmem [#allocation8], %s272
        %p274 = scmp.lt.s32.totalorder %s27, 0
        %s275 = scalar_select %p274, %s27, 0
        %s276 = scalar_lea.vmem %s2, %s275
        %p277 = scmp.lt.s32.totalorder %s27, 0
        %s278 = scalar_select %p277, %s27, 0
        %s279 = scalar_lea.vmem %s3, %s278
        %v281 = vld [vmem:[%s276] sm:$0x1]
        %v282 = vld [vmem:[%s279] sm:$0x1]
        %v283 = vld [vmem:[%s239] sm:$0xff]
        %v284 = vld [vmem:[%s239 + $0x8] sm:$0xff]
        %v285 = vld [vmem:[%s239 + $0x10] sm:$0xff]
        %v286 = vld [vmem:[%s239 + $0x18] sm:$0xff]
        %v287 = vld [vmem:[%s239 + $0x20] sm:$0xff]
        %v288 = vld [vmem:[%s239 + $0x28] sm:$0xff]
        %v289 = vld [vmem:[%s239 + $0x30] sm:$0xff]
        %v290 = vld [vmem:[%s239 + $0x38] sm:$0xff]
        %v291 = vld [vmem:[#allocation6] sm:$0xf]
        %v292 = vld [vmem:[#allocation6 + $0x4] sm:$0xf]
        %v293 = vld [vmem:[#allocation6 + $0x8] sm:$0xf]
        %v294 = vld [vmem:[#allocation6 + $0xc] sm:$0xf]
        %v295 = vld [vmem:[#allocation6 + $0x10] sm:$0xf]
        %v296 = vld [vmem:[#allocation6 + $0x14] sm:$0xf]
        %v297 = vld [vmem:[#allocation6 + $0x18] sm:$0xf]
        %v298 = vld [vmem:[#allocation6 + $0x1c] sm:$0xf]
        %v299 = vld [vmem:[#allocation6 + $0x20] sm:$0xf]
        %v300 = vld [vmem:[#allocation6 + $0x24] sm:$0xf]
        %v301 = vld [vmem:[#allocation6 + $0x28] sm:$0xf]
        %v302 = vld [vmem:[#allocation6 + $0x2c] sm:$0xf]
        %v303 = vld [vmem:[#allocation6 + $0x30] sm:$0xf]
        %v304 = vld [vmem:[#allocation6 + $0x34] sm:$0xf]
        %v305 = vld [vmem:[#allocation6 + $0x38] sm:$0xf]
        %v306 = vld [vmem:[#allocation6 + $0x3c] sm:$0xf]
        %v307 = vld [vmem:[#allocation6 + $0x40] sm:$0xf]
        %v308 = vld [vmem:[#allocation6 + $0x44] sm:$0xf]
        %v309 = vld [vmem:[#allocation6 + $0x48] sm:$0xf]
        %v310 = vld [vmem:[#allocation6 + $0x4c] sm:$0xf]
        %v311 = vld [vmem:[#allocation6 + $0x50] sm:$0xf]
        %v312 = vld [vmem:[#allocation6 + $0x54] sm:$0xf]
        %v313 = vld [vmem:[#allocation6 + $0x58] sm:$0xf]
        %v314 = vld [vmem:[#allocation6 + $0x5c] sm:$0xf]
        %v315 = vld [vmem:[#allocation6 + $0x60] sm:$0xf]
        %v316 = vld [vmem:[#allocation6 + $0x64] sm:$0xf]
        %v317 = vld [vmem:[#allocation6 + $0x68] sm:$0xf]
        %v318 = vld [vmem:[#allocation6 + $0x6c] sm:$0xf]
        %v319 = vld [vmem:[#allocation6 + $0x70] sm:$0xf]
        %v320 = vld [vmem:[#allocation6 + $0x74] sm:$0xf]
        %v321 = vld [vmem:[#allocation6 + $0x78] sm:$0xf]
        %v322 = vld [vmem:[#allocation6 + $0x7c] sm:$0xf]
        %v331 = vunpack.c.l.b16 %v283
        %v332 = vunpack.c.h.b16 %v283
        %v333 = vunpack.c.l.b16 %v284
        %v334 = vunpack.c.h.b16 %v284
        %v335 = vunpack.c.l.b16 %v285
        %v336 = vunpack.c.h.b16 %v285
        %v337 = vunpack.c.l.b16 %v286
        %v338 = vunpack.c.h.b16 %v286
        %v339 = vunpack.c.l.b16 %v287
        %v340 = vunpack.c.h.b16 %v287
        %v341 = vunpack.c.l.b16 %v288
        %v342 = vunpack.c.h.b16 %v288
        %v343 = vunpack.c.l.b16 %v289
        %v344 = vunpack.c.h.b16 %v289
        %v345 = vunpack.c.l.b16 %v290
        %v346 = vunpack.c.h.b16 %v290
        %v347 = vpack.c.b16 %v333, %v331
        %v348 = vpack.c.b16 %v334, %v332
        %v349 = vpack.c.b16 %v337, %v335
        %v350 = vpack.c.b16 %v338, %v336
        %v351 = vpack.c.b16 %v341, %v339
        %v352 = vpack.c.b16 %v342, %v340
        %v353 = vpack.c.b16 %v345, %v343
        %v354 = vpack.c.b16 %v346, %v344
        %v395 = vunpack.c.l.b16 %v291
        %v396 = vunpack.c.l.b16 %v292
        %v397 = vunpack.c.l.b16 %v293
        %v398 = vunpack.c.l.b16 %v294
        %v399 = vunpack.c.l.b16 %v295
        %v400 = vunpack.c.l.b16 %v296
        %v401 = vunpack.c.l.b16 %v297
        %v402 = vunpack.c.l.b16 %v298
        %v403 = vunpack.c.l.b16 %v299
        %v404 = vunpack.c.l.b16 %v300
        %v405 = vunpack.c.l.b16 %v301
        %v406 = vunpack.c.l.b16 %v302
        %v407 = vunpack.c.l.b16 %v303
        %v408 = vunpack.c.l.b16 %v304
        %v409 = vunpack.c.l.b16 %v305
        %v410 = vunpack.c.l.b16 %v306
        %v411 = vunpack.c.l.b16 %v307
        %v412 = vunpack.c.l.b16 %v308
        %v413 = vunpack.c.l.b16 %v309
        %v414 = vunpack.c.l.b16 %v310
        %v415 = vunpack.c.l.b16 %v311
        %v416 = vunpack.c.l.b16 %v312
        %v417 = vunpack.c.l.b16 %v313
        %v418 = vunpack.c.l.b16 %v314
        %v419 = vunpack.c.l.b16 %v315
        %v420 = vunpack.c.l.b16 %v316
        %v421 = vunpack.c.l.b16 %v317
        %v422 = vunpack.c.l.b16 %v318
        %v423 = vunpack.c.l.b16 %v319
        %v424 = vunpack.c.l.b16 %v320
        %v425 = vunpack.c.l.b16 %v321
        %v426 = vunpack.c.l.b16 %v322
        %v427 = vpack.c.b16 %v396, %v395
        %v428 = vpack.c.b16 %v398, %v397
        %v429 = vpack.c.b16 %v400, %v399
        %v430 = vpack.c.b16 %v402, %v401
        %v431 = vpack.c.b16 %v404, %v403
        %v432 = vpack.c.b16 %v406, %v405
        %v433 = vpack.c.b16 %v408, %v407
        %v434 = vpack.c.b16 %v410, %v409
        %v435 = vpack.c.b16 %v412, %v411
        %v436 = vpack.c.b16 %v414, %v413
        %v437 = vpack.c.b16 %v416, %v415
        %v438 = vpack.c.b16 %v418, %v417
        %v439 = vpack.c.b16 %v420, %v419
        %v440 = vpack.c.b16 %v422, %v421
        %v441 = vpack.c.b16 %v424, %v423
        %v442 = vpack.c.b16 %v426, %v425
        %459 = vmatprep.subr.bf16.mxu0 0
        %460 = vmatpush1.bf16.msra.mxu0 %v434
        %461 = vmatprep.subr.bf16.mxu0 0
        %462 = vmatpush1.bf16.msra.mxu0 %v433
        %463 = vmatprep.subr.bf16.mxu0 0
        %464 = vmatpush1.bf16.msra.mxu0 %v432
        %465 = vmatprep.subr.bf16.mxu0 0
        %466 = vmatpush1.bf16.msra.mxu0 %v431
        %467 = vmatprep.subr.bf16.mxu0 0
        %468 = vmatpush1.bf16.msra.mxu0 %v430
        %469 = vmatprep.subr.bf16.mxu0 0
        %470 = vmatpush1.bf16.msra.mxu0 %v429
        %471 = vmatprep.subr.bf16.mxu0 0
        %472 = vmatpush1.bf16.msra.mxu0 %v428
        %473 = vmatprep.subr.bf16.mxu0 0
        %474 = vmatpush1.bf16.msra.mxu0 %v427
        %475 = vmatprep.subr.bf16.mxu0 0
        %476 = vmatpush2.bf16.msra.mxu0 %v442
        %477 = vmatprep.subr.bf16.mxu0 0
        %478 = vmatpush2.bf16.msra.mxu0 %v441
        %479 = vmatprep.subr.bf16.mxu0 0
        %480 = vmatpush2.bf16.msra.mxu0 %v440
        %481 = vmatprep.subr.bf16.mxu0 0
        %482 = vmatpush2.bf16.msra.mxu0 %v439
        %483 = vmatprep.subr.bf16.mxu0 0
        %484 = vmatpush2.bf16.msra.mxu0 %v438
        %485 = vmatprep.subr.bf16.mxu0 0
        %486 = vmatpush2.bf16.msra.mxu0 %v437
        %487 = vmatprep.subr.bf16.mxu0 0
        %488 = vmatpush2.bf16.msra.mxu0 %v436
        %489 = vmatprep.subr.bf16.mxu0 0
        %490 = vmatpush2.bf16.msra.mxu0 %v435
        %491 = vmatprep.mubr.bf16.mxu0 %v348
        %492 = vmatmul.mubr.bf16.gmra.mxu0 %v347
        %v493 = vpop.f32.mrf.mxu0
        %v494 = vadd.f32 0.0, %v493
        %v495 = vpop.f32.mrf.mxu0
        %v496 = vpop.f32.mrf.mxu0
        %v497 = vadd.f32 0.0, %v496
        %v498 = vpop.f32.mrf.mxu0
        %499 = vmatprep.mubr.bf16.mxu0 %v350
        %500 = vmatmul.mubr.bf16.gmra.mxu0 %v349
        %v501 = vpop.f32.mrf.mxu0
        %v502 = vadd.f32 0.0, %v501
        %v503 = vpop.f32.mrf.mxu0
        %v504 = vpop.f32.mrf.mxu0
        %v505 = vadd.f32 0.0, %v504
        %v506 = vpop.f32.mrf.mxu0
        %507 = vmatprep.mubr.bf16.mxu0 %v352
        %508 = vmatmul.mubr.bf16.gmra.mxu0 %v351
        %v509 = vpop.f32.mrf.mxu0
        %v510 = vadd.f32 0.0, %v509
        %v511 = vpop.f32.mrf.mxu0
        %v512 = vpop.f32.mrf.mxu0
        %v513 = vadd.f32 0.0, %v512
        %v514 = vpop.f32.mrf.mxu0
        %515 = vmatprep.mubr.bf16.mxu0 %v354
        %516 = vmatmul.mubr.bf16.gmra.mxu0 %v353
        %v517 = vpop.f32.mrf.mxu0
        %v518 = vadd.f32 0.0, %v517
        %v519 = vpop.f32.mrf.mxu0
        %v520 = vpop.f32.mrf.mxu0
        %v521 = vadd.f32 0.0, %v520
        %v522 = vpop.f32.mrf.mxu0
        %523 = vdwg.mxu0
        %524 = vst [vmem:[#allocation2] sm:$0xff] %v494
        %525 = vst [vmem:[#allocation2 + $0x8] sm:$0xff] %v497
        %526 = vst [vmem:[#allocation2 + $0x10] sm:$0xff] %v502
        %527 = vst [vmem:[#allocation2 + $0x18] sm:$0xff] %v505
        %528 = vst [vmem:[#allocation2 + $0x20] sm:$0xff] %v510
        %529 = vst [vmem:[#allocation2 + $0x28] sm:$0xff] %v513
        %530 = vst [vmem:[#allocation2 + $0x30] sm:$0xff] %v518
        %531 = vst [vmem:[#allocation2 + $0x38] sm:$0xff] %v521
        %v532 = vld [vmem:[#allocation2] sm:$0xff]
        %v534 = vlaneseq
        %v535 = vshrl.u32 %v534, 7
        %v536 = vsub.s32 0, %v535
        %v537 = vrot.slane %v281, %v536
        %v539 = vmul.f32 %v532, %v537
        %v541 = vlaneseq
        %v542 = vshrl.u32 %v541, 7
        %v543 = vsub.s32 0, %v542
        %v544 = vrot.slane %v282, %v543
        %v546 = vadd.f32 %v539, %v544
        %v547 = vmax.f32 %v546, 0.0
        %v548 = vpack.c.bf16 %v547, %v547
        %549 = vst [vmem:[%s273] sm:$0xf] %v548
        %v550 = vld [vmem:[#allocation2 + $0x8] sm:$0xff]
        %v551 = vmul.f32 %v550, %v537
        %v552 = vadd.f32 %v551, %v544
        %v553 = vmax.f32 %v552, 0.0
        %v554 = vpack.c.bf16 %v553, %v553
        %s555 = scalar_lea.vmem %s273, 4 [#allocation8]
        %556 = vst [vmem:[%s555] sm:$0xf] %v554
        %v557 = vld [vmem:[#allocation2 + $0x10] sm:$0xff]
        %v558 = vmul.f32 %v557, %v537
        %v559 = vadd.f32 %v558, %v544
        %v560 = vmax.f32 %v559, 0.0
        %v561 = vpack.c.bf16 %v560, %v560
        %s562 = scalar_lea.vmem %s273, 8 [#allocation8]
        %563 = vst [vmem:[%s562] sm:$0xf] %v561
        %v564 = vld [vmem:[#allocation2 + $0x18] sm:$0xff]
        %v565 = vmul.f32 %v564, %v537
        %v566 = vadd.f32 %v565, %v544
        %v567 = vmax.f32 %v566, 0.0
        %v568 = vpack.c.bf16 %v567, %v567
        %s569 = scalar_lea.vmem %s273, 12 [#allocation8]
        %570 = vst [vmem:[%s569] sm:$0xf] %v568
        %v571 = vld [vmem:[#allocation2 + $0x20] sm:$0xff]
        %v572 = vmul.f32 %v571, %v537
        %v573 = vadd.f32 %v572, %v544
        %v574 = vmax.f32 %v573, 0.0
        %v575 = vpack.c.bf16 %v574, %v574
        %s576 = scalar_lea.vmem %s273, 16 [#allocation8]
        %577 = vst [vmem:[%s576] sm:$0xf] %v575
        %v578 = vld [vmem:[#allocation2 + $0x28] sm:$0xff]
        %v579 = vmul.f32 %v578, %v537
        %v580 = vadd.f32 %v579, %v544
        %v581 = vmax.f32 %v580, 0.0
        %v582 = vpack.c.bf16 %v581, %v581
        %s583 = scalar_lea.vmem %s273, 20 [#allocation8]
        %584 = vst [vmem:[%s583] sm:$0xf] %v582
        %v585 = vld [vmem:[#allocation2 + $0x30] sm:$0xff]
        %v586 = vmul.f32 %v585, %v537
        %v587 = vadd.f32 %v586, %v544
        %v588 = vmax.f32 %v587, 0.0
        %v589 = vpack.c.bf16 %v588, %v588
        %s590 = scalar_lea.vmem %s273, 24 [#allocation8]
        %591 = vst [vmem:[%s590] sm:$0xf] %v589
        %v592 = vld [vmem:[#allocation2 + $0x38] sm:$0xff]
        %v593 = vmul.f32 %v592, %v537
        %v594 = vadd.f32 %v593, %v544
        %v595 = vmax.f32 %v594, 0.0
        %v596 = vpack.c.bf16 %v595, %v595
        %s597 = scalar_lea.vmem %s273, 28 [#allocation8]
        %598 = vst [vmem:[%s597] sm:$0xf] %v596
        %s599 = sand.u32 %s148, 1
        %s600 = scalar_lea.sflag [#allocation5], %s599
        %s601 = sand.u32 %s148, 1
        %s602 = smul.addr %s601, 32
        %s603 = scalar_lea.vmem [#allocation8], %s602
        // Predicated region
        $region45: #{tpu_custom_call.1} parent=35 // pred_check
          %p604 = pneg %p158
        $region46: #{tpu_custom_call.1} parent=35 // pred_check_branch
          %606 = sbr.rel (%p604) target = $region48
        $region47: #{tpu_custom_call.1} parent=35 // pred_region
          %s608 = ssub.s32 512, 512
          %609 = vsyncadd %s600, %s608
          %s610 = smul.addr %s26, 8
          %s611 = sadd.s32 %s27, %s610
          %s612 = smul.addr %s611, 64
          %s613 = scalar_lea.hbm %s4, %s612
          %s614 = sshll.u32 %s603, 4
          %s615 = int_to_ptr.vmem [resolvable:$true] %s614
          %620 = dma.vmem_to_hbm [thread:$0]  %s615, 512, %s613, %s600, 64, 64, 4
        $region48: #{tpu_custom_call.1} parent=35 // pred_fallthru
          _
      $region36: #{tpu_custom_call.1} parent=5 // pred_fallthru
        _
      %p621 = scmp.le.s32.totalorder 2, %s17
      // Predicated region
      $region49: #{tpu_custom_call.1} parent=5 // pred_check
        %p622 = pneg %p621
      $region50: #{tpu_custom_call.1} parent=5 // pred_check_branch
        %624 = sbr.rel (%p622) target = $region52
      $region51: #{tpu_custom_call.1} parent=5 // pred_region
        %s625 = ssub.s32 %s17, 2
        // Predicated region
        $region53: #{tpu_custom_call.1} parent=51 // pred_check
          %p626 = pneg %p164
        $region54: #{tpu_custom_call.1} parent=51 // pred_check_branch
          %628 = sbr.rel (%p626) target = $region56
        $region55: #{tpu_custom_call.1} parent=51 // pred_region
          %s629 = sand.u32 %s149, 1
          %s630 = scalar_lea.sflag [#allocation5], %s629
          %s631 = sand.u32 %s149, 1
          %s632 = smul.addr %s631, 32
          %s633 = scalar_lea.vmem [#allocation8], %s632
          %634 = dma.done %s630, 512
        $region56: #{tpu_custom_call.1} parent=51 // pred_fallthru
          _
      $region52: #{tpu_custom_call.1} parent=5 // pred_fallthru
        _
    $region6: #{tpu_custom_call.1} parent=1 // loop_footer
      %s21 = sadd.s32 1, %s17
    $region7: #{tpu_custom_call.1} parent=1 // loop_footer_branch
      %16 = sbr.rel target = $region3
    $region8: #{tpu_custom_call.1} parent=1 // loop_exit
      _
    %635 = vsyncpa [#allocation4], 1
    %s636 = scalar_lea.sflag [#allocation4], 1
    %637 = vsyncpa %s636, 1
    %638 = vsyncpa [#allocation7], 1
    %639 = vsyncpa [#allocation5], 1
    %s640 = scalar_lea.sflag [#allocation5], 1
    %641 = vsyncpa %s640, 1

</llo_original>
